<compile_context>
chip_gen: v7x
topology: tpu7x:2x2x1
jax: 0.10.0
libtpu: 0.0.40
codegen_flags: <defaults>
</compile_context>

<pallas_src>
import functools

import jax
import jax.numpy as jnp
from jax import lax
from jax.experimental import pallas as pl
from jax.experimental.pallas import tpu as pltpu

_LANES = 128      # lane width: batch-tile granularity of the transposed output
_SUBLANES = 8     # f32 sublane width: padding granularity for num_outputs
_MAX_TB = 4096    # default cap on the batch tile (amortizes per-step overhead)


def diag_gaussian_mean_kernel(x_ref, w_ref, b_ref, mean_t_ref):
    # mean_T = W @ x^T + b, computed directly in (O_pad, TB) layout so the
    # batch sits on lanes and the tiny output dim sits on sublanes.
    #   x_ref: (TB, K), w_ref: (O_pad, K) -> contract both on axis 1 (K); the
    #   MXU consumes both operands in their native layouts (no transposes).
    mean_t = lax.dot_general(
        w_ref[...],
        x_ref[...],
        dimension_numbers=(((1,), (1,)), ((), ())),
        preferred_element_type=jnp.float32,
    )  # (O_pad, TB) f32 accumulation
    # Bias is (O_pad, 1): broadcasts along the lane (batch) axis.
    mean_t_ref[...] = (mean_t + b_ref[...]).astype(mean_t_ref.dtype)


def _auto_tile(batch):
    """Largest 128-multiple tile <= _MAX_TB that still yields a >=2-step grid
    (keeps both v7x TensorCores busy); floors at one 128-lane tile."""
    half = pl.cdiv(batch, 2)
    return max(_LANES, min(_MAX_TB, pl.cdiv(half, _LANES) * _LANES))


@functools.partial(jax.jit, static_argnames=("tb",))
def diag_gaussian_forward(x, w_mean, b_mean, logstd, *, tb=None):
    """x: (B, num_inputs); w_mean: (num_outputs, num_inputs);
    b_mean, logstd: (num_outputs,).

    Returns (action_mean, action_std) — the parameters of
    Normal(action_mean, action_std).  action_mean is (B, num_outputs);
    action_std is (num_outputs,) and broadcasts against the mean exactly as
    torch.distributions.Normal would (it is batch-independent, so we do not
    materialize a (B, num_outputs) copy of it).
    """
    B, K = x.shape
    O = w_mean.shape[0]

    # Pad num_outputs only to the f32 sublane width (8), not to 128 lanes.
    o_pad = max(_SUBLANES, pl.cdiv(O, _SUBLANES) * _SUBLANES)

    if tb is None:
        tb = _auto_tile(B)
    assert tb % _LANES == 0, "tb must be a multiple of 128 (output lane width)"

    grid = (pl.cdiv(B, tb),)  # unpadded x: Pallas clips the trailing block

    # Pad the tiny weight/bias (NOT the activations). Zero rows contribute
    # nothing to the valid outputs.
    w_p = jnp.zeros((o_pad, K), w_mean.dtype).at[:O, :].set(w_mean)
    bias_p = jnp.zeros((o_pad, 1), b_mean.dtype).at[:O, 0].set(b_mean)

    itemsize = jnp.dtype(x.dtype).itemsize
    cost = pl.CostEstimate(
        flops=2 * B * K * o_pad,
        transcendentals=0,
        bytes_accessed=(B * K + o_pad * K + o_pad + o_pad * B) * itemsize,
    )

    mean_t = pl.pallas_call(
        diag_gaussian_mean_kernel,
        out_shape=jax.ShapeDtypeStruct((o_pad, B), x.dtype),
        grid_spec=pltpu.PrefetchScalarGridSpec(
            num_scalar_prefetch=0,
            grid=grid,
            in_specs=[
                # Activations stream over the batch axis.
                pl.BlockSpec((tb, K), lambda i: (i, 0)),
                # Weight + bias: constant block index -> stay VMEM-resident,
                # their DMA is not re-issued across grid steps.
                pl.BlockSpec((o_pad, K), lambda i: (0, 0)),
                pl.BlockSpec((o_pad, 1), lambda i: (0, 0)),
            ],
            # Transposed output: batch on lanes, padded num_outputs (8
            # sublanes) on sublanes -> unmasked, lane-dense stores.
            out_specs=pl.BlockSpec((o_pad, tb), lambda i: (0, i)),
        ),
        compiler_params=pltpu.CompilerParams(
            # Batch tiles are independent -> v7x's dual TCs split the grid.
            dimension_semantics=("parallel",)),
        cost_estimate=cost,
    )(x, w_p, bias_p)

    # Drop the sublane padding and restore the module's (B, num_outputs)
    # layout. This touches only O*B elements (vs 128*B with lane padding).
    action_mean = mean_t[:O, :].T

    # std = exp(logstd) is batch-independent: return it as (num_outputs,) and
    # let the consumer broadcast lazily (matches Normal's broadcasting of the
    # AddBias-on-zeros logstd).
    action_std = jnp.exp(logstd)

    # TODO(synk): torch.distributions.Normal object itself has no Pallas
    # equivalent; we return its two parameters (mean, std).
    return action_mean, action_std


if __name__ == "__main__":
    key = jax.random.PRNGKey(0)
    k_x, k_w = jax.random.split(key)

    batch = 384          # NOT a multiple of the auto tile (256): exercises the
                         # clipped trailing block path (no wrapper x padding)
    num_inputs = 64
    num_outputs = 6      # deliberately not a multiple of 8: exercises sublane pad

    # Deterministic parameter init mirroring the module's __init__ (zll=False):
    #   fc_mean.weight: orthogonal, fc_mean.bias: zeros, logstd bias: zeros.
    w_mean = jax.nn.initializers.orthogonal()(
        k_w, (num_outputs, num_inputs), jnp.float32)
    b_mean = jnp.zeros((num_outputs,), jnp.float32)
    logstd = jnp.zeros((num_outputs,), jnp.float32)

    x = jax.random.normal(k_x, (batch, num_inputs), jnp.float32)

    mean, std = diag_gaussian_forward(x, w_mean, b_mean, logstd)
    jax.block_until_ready((mean, std))

    # Reference check in plain JAX.
    ref_mean = x @ w_mean.T + b_mean
    ref_std = jnp.exp(logstd)
    assert mean.shape == (batch, num_outputs), mean.shape
    assert std.shape == (num_outputs,), std.shape
    assert jnp.allclose(mean, ref_mean, atol=1e-5, rtol=1e-5)
    assert jnp.allclose(std, ref_std, atol=1e-6, rtol=1e-6)

    print("KERNEL_OK")
</pallas_src>

<mosaic_0001>
module attributes {stable_mosaic.version = 11 : i64} {
  func.func @diag_gaussian_mean_kernel(%arg0: i32, %arg1: memref<256x64xf32, #tpu.memory_space<vmem>>, %arg2: memref<8x64xf32, #tpu.memory_space<vmem>>, %arg3: memref<8x1xf32, #tpu.memory_space<vmem>>, %arg4: memref<8x256xf32, #tpu.memory_space<vmem>>) attributes {dimension_semantics = [#tpu.dimension_semantics<parallel>], iteration_bounds = array<i64: 2>, scalar_prefetch = 0 : i64, scratch_operands = 0 : i64, tpu.core_type = #tpu.core_type<tc>, window_params = [{transform_indices = @transform_0, window_bounds = array<i64: 256, 64>}, {pipeline_mode = #tpu.pipeline_mode<synchronous>, transform_indices = @transform_1, window_bounds = array<i64: 8, 64>}, {pipeline_mode = #tpu.pipeline_mode<synchronous>, transform_indices = @transform_2, window_bounds = array<i64: 8, 1>}, {transform_indices = @transform_3, window_bounds = array<i64: 8, 256>}]} {
    %c0 = arith.constant 0 : index
    %c0_0 = arith.constant 0 : index
    %0 = vector.load %arg2[%c0, %c0_0] : memref<8x64xf32, #tpu.memory_space<vmem>>, vector<8x64xf32>
    %c0_1 = arith.constant 0 : index
    %c0_2 = arith.constant 0 : index
    %1 = vector.load %arg1[%c0_1, %c0_2] : memref<256x64xf32, #tpu.memory_space<vmem>>, vector<256x64xf32>
    %cst = arith.constant dense<0.000000e+00> : vector<8x256xf32>
    %2 = tpu.matmul %0, %1, %cst {dimension_numbers = #tpu.dot_dimension_numbers<[1], [1], [0], [0], [0, 0, 1, 0], [], []>} : vector<8x64xf32>, vector<256x64xf32>, vector<8x256xf32> -> vector<8x256xf32>
    %c0_3 = arith.constant 0 : index
    %c0_4 = arith.constant 0 : index
    %3 = vector.load %arg3[%c0_3, %c0_4] : memref<8x1xf32, #tpu.memory_space<vmem>>, vector<8x1xf32>
    %4 = vector.broadcast %3 : vector<8x1xf32> to vector<8x256xf32>
    %5 = arith.addf %2, %4 : vector<8x256xf32>
    %c0_5 = arith.constant 0 : index
    %c0_6 = arith.constant 0 : index
    %6 = vector.load %arg4[%c0_5, %c0_6] : memref<8x256xf32, #tpu.memory_space<vmem>>, vector<8x256xf32>
    tpu.vector_store %arg4[%c0_5, %c0_6], %5 {strides = array<i32>} : memref<8x256xf32, #tpu.memory_space<vmem>>, vector<8x256xf32>,
    return
  }
  func.func @transform_0(%arg0: i32) -> (i32, i32) {
    %c0_i32 = arith.constant 0 : i32
    %c0_i32_0 = arith.constant 0 : i32
    return %arg0, %c0_i32 : i32, i32
  }
  func.func @transform_1(%arg0: i32) -> (i32, i32) {
    %c0_i32 = arith.constant 0 : i32
    %c0_i32_0 = arith.constant 0 : i32
    %c0_i32_1 = arith.constant 0 : i32
    return %c0_i32, %c0_i32_0 : i32, i32
  }
  func.func @transform_2(%arg0: i32) -> (i32, i32) {
    %c0_i32 = arith.constant 0 : i32
    %c0_i32_0 = arith.constant 0 : i32
    %c0_i32_1 = arith.constant 0 : i32
    return %c0_i32, %c0_i32_0 : i32, i32
  }
  func.func @transform_3(%arg0: i32) -> (i32, i32) {
    %c0_i32 = arith.constant 0 : i32
    %c0_i32_0 = arith.constant 0 : i32
    return %c0_i32, %arg0 : i32, i32
  }
}

</mosaic_0001>

<llo_original>
// kernel: diag_gaussian_forward.1
$region0: #{diag_gaussian_forward.1}
  #allocation0 [shape = 'u32[]', space=smem, size = 0x4, offset = 0x4, fixed_abs, tag = 'smem constant byte address 0x4 - core index']
  #allocation1 [shape = 'u32[144,128]{1,0:T(1,128)}', space=vmem, size = 0x12000, scoped, tag = 'internal scratch']
  %s0 = inlined_call_operand.vmem [shape: f32[384,64], index: 0, kind: input, shape index: {}]
  %s1 = inlined_call_operand.vmem [shape: f32[8,64], index: 1, kind: input, shape index: {}]
  %s2 = inlined_call_operand.vmem [shape: f32[8,1], index: 2, kind: input, shape index: {}]
  %s3 = inlined_call_operand.vmem [shape: f32[8,384], index: 3, kind: output, shape index: {}]
  %s4 = sld [smem:[#allocation0]]
  $region107: #{diag_gaussian_forward.1} parent=0
    _
  %s6 = ssub.s32 1, %s4
  %s7 = scalar_select 0, %s6, %s4
  $region1: #{diag_gaussian_forward.1} parent=0
    #allocation2 [shape = 'u8[16384]{0}', space=vmem, size = 0x4000, scoped, tag = 'output window, operand 0']
    loop: start=0, step=1, limit=4
    $region2: #{diag_gaussian_forward.1} parent=1 // loop_pre_header
      _
    $region3: #{diag_gaussian_forward.1} parent=1 // loop_header
      %s9 = sphi 0, %s13
      %p10 = scmp.ge.s32.totalorder %s9, 4
      %s19 = sphi 0, %s21
      %s22 = sphi 0, %s19
      %s23 = sphi 0, %s22
      %s39 = sphi 0, %s23
      %s43 = sphi 0, %s43
      %s45 = sphi 0, %s43
      %s46 = sphi 0, %s45
      %s60 = sphi 0, %s46
      %s64 = sphi 0, %s64
      %s66 = sphi 0, %s64
      %s67 = sphi 0, %s66
      %s81 = sphi 0, %s67
      %s87 = sphi 0, %s89
      %s90 = sphi 0, %s87
      %s91 = sphi 0, %s90
      %s107 = sphi 0, %s91
    $region4: #{diag_gaussian_forward.1} parent=1 // loop_header_branch
      %12 = sbr.rel (%p10) target = $region8
    $region5: #{diag_gaussian_forward.1} parent=1 // loop_body
      %s14 = ssub.s32 %s9, 1
      %s15 = ssub.s32 %s9, 2
      %s16 = sadd.s32 %s9, 1
      %s17 = ssub.s32 %s9, %s16
      %p18 = scmp.eq.s32.totalorder %s17, 0
      %s20 = sadd.s32 %s19, 1
      %s21 = scalar_select %p18, %s19, %s20
      %p24 = pneg %p18
      %p25 = scmp.eq.s32.totalorder %s9, 1
      %p26 = por %p24, %p25
      %p27 = scmp.ne.s32.totalorder %s19, %s22
      %p28 = scmp.eq.s32.totalorder %s9, 0
      %p29 = por %p27, %p28
      %p30 = scmp.ne.s32.totalorder %s19, %s22
      %p31 = scmp.eq.s32.totalorder %s14, 1
      %p32 = por %p30, %p31
      %p33 = scmp.ne.s32.totalorder %s22, %s23
      %p34 = scmp.eq.s32.totalorder %s14, 0
      %p35 = por %p33, %p34
      %p36 = scmp.ne.s32.totalorder %s22, %s23
      %p37 = scmp.eq.s32.totalorder %s15, 1
      %p38 = por %p36, %p37
      %p40 = scmp.ne.s32.totalorder %s23, %s39
      %p41 = scmp.eq.s32.totalorder %s15, 0
      %p42 = por %p40, %p41
      %s44 = sadd.s32 %s43, 1
      %p47 = scmp.eq.s32.totalorder %s9, 1
      %p48 = scmp.ne.s32.totalorder %s43, %s45
      %p49 = scmp.eq.s32.totalorder %s9, 0
      %p50 = por %p48, %p49
      %p51 = scmp.ne.s32.totalorder %s43, %s45
      %p52 = scmp.eq.s32.totalorder %s14, 1
      %p53 = por %p51, %p52
      %p54 = scmp.ne.s32.totalorder %s45, %s46
      %p55 = scmp.eq.s32.totalorder %s14, 0
      %p56 = por %p54, %p55
      %p57 = scmp.ne.s32.totalorder %s45, %s46
      %p58 = scmp.eq.s32.totalorder %s15, 1
      %p59 = por %p57, %p58
      %p61 = scmp.ne.s32.totalorder %s46, %s60
      %p62 = scmp.eq.s32.totalorder %s15, 0
      %p63 = por %p61, %p62
      %s65 = sadd.s32 %s64, 1
      %p68 = scmp.eq.s32.totalorder %s9, 1
      %p69 = scmp.ne.s32.totalorder %s64, %s66
      %p70 = scmp.eq.s32.totalorder %s9, 0
      %p71 = por %p69, %p70
      %p72 = scmp.ne.s32.totalorder %s64, %s66
      %p73 = scmp.eq.s32.totalorder %s14, 1
      %p74 = por %p72, %p73
      %p75 = scmp.ne.s32.totalorder %s66, %s67
      %p76 = scmp.eq.s32.totalorder %s14, 0
      %p77 = por %p75, %p76
      %p78 = scmp.ne.s32.totalorder %s66, %s67
      %p79 = scmp.eq.s32.totalorder %s15, 1
      %p80 = por %p78, %p79
      %p82 = scmp.ne.s32.totalorder %s67, %s81
      %p83 = scmp.eq.s32.totalorder %s15, 0
      %p84 = por %p82, %p83
      %s85 = ssub.s32 %s9, %s16
      %p86 = scmp.eq.s32.totalorder %s85, 0
      %s88 = sadd.s32 %s87, 1
      %s89 = scalar_select %p86, %s87, %s88
      %p92 = pneg %p86
      %p93 = scmp.eq.s32.totalorder %s9, 1
      %p94 = por %p92, %p93
      %p95 = scmp.ne.s32.totalorder %s87, %s90
      %p96 = scmp.eq.s32.totalorder %s9, 0
      %p97 = por %p95, %p96
      %p98 = scmp.ne.s32.totalorder %s87, %s90
      %p99 = scmp.eq.s32.totalorder %s14, 1
      %p100 = por %p98, %p99
      %p101 = scmp.ne.s32.totalorder %s90, %s91
      %p102 = scmp.eq.s32.totalorder %s14, 0
      %p103 = por %p101, %p102
      %p104 = scmp.ne.s32.totalorder %s90, %s91
      %p105 = scmp.eq.s32.totalorder %s15, 1
      %p106 = por %p104, %p105
      %p108 = scmp.ne.s32.totalorder %s91, %s107
      %p109 = scmp.eq.s32.totalorder %s15, 0
      %p110 = por %p108, %p109
      %p111 = scmp.le.s32.totalorder 1, %s9
      %p112 = scmp.lt.s32.totalorder %s9, 3
      %p113 = pnand %p111, %p112
      %p114 = pneg %p113
      // Predicated region
      $region9: #{diag_gaussian_forward.1} parent=5 // pred_check
        _
      $region10: #{diag_gaussian_forward.1} parent=5 // pred_check_branch
        %116 = sbr.rel (%p113) target = $region12
      $region11: #{diag_gaussian_forward.1} parent=5 // pred_region
        %s117 = ssub.s32 %s9, 1
        // Predicated region
        $region13: #{diag_gaussian_forward.1} parent=11 // pred_check
          %p118 = pneg %p56
        $region14: #{diag_gaussian_forward.1} parent=11 // pred_check_branch
          %120 = sbr.rel (%p118) target = $region16
        $region15: #{diag_gaussian_forward.1} parent=11 // pred_region
          _
        $region16: #{diag_gaussian_forward.1} parent=11 // pred_fallthru
          _
        // Predicated region
        $region17: #{diag_gaussian_forward.1} parent=11 // pred_check
          %p121 = pneg %p77
        $region18: #{diag_gaussian_forward.1} parent=11 // pred_check_branch
          %123 = sbr.rel (%p121) target = $region20
        $region19: #{diag_gaussian_forward.1} parent=11 // pred_region
          _
        $region20: #{diag_gaussian_forward.1} parent=11 // pred_fallthru
          _
      $region12: #{diag_gaussian_forward.1} parent=5 // pred_fallthru
        _
      %p124 = scmp.lt.s32.totalorder %s9, 2
      // Predicated region
      $region21: #{diag_gaussian_forward.1} parent=5 // pred_check
        %p125 = pneg %p124
      $region22: #{diag_gaussian_forward.1} parent=5 // pred_check_branch
        %127 = sbr.rel (%p125) target = $region24
      $region23: #{diag_gaussian_forward.1} parent=5 // pred_region
        // Predicated region
        $region25: #{diag_gaussian_forward.1} parent=23 // pred_check
          %p128 = pneg %p29
        $region26: #{diag_gaussian_forward.1} parent=23 // pred_check_branch
          %130 = sbr.rel (%p128) target = $region28
        $region27: #{diag_gaussian_forward.1} parent=23 // pred_region
          %s131 = smul.u32 32, %s9
          %s132 = ssub.s32 48, %s131
          %p133 = scmp.lt.s32.totalorder %s132, 32
          %s134 = scalar_select %p133, %s132, 32
          %s135 = smul.u32 128, %s134
          %p136 = scmp.lt.s32.totalorder %s131, 47
          %s137 = scalar_select %p136, %s131, 47
          %s138 = smul.addr %s137, 8
          %s139 = scalar_lea.vmem %s0, %s138
          %s140 = smul.u32 32, %s9
          %s141 = ssub.s32 48, %s140
          %p142 = scmp.lt.s32.totalorder %s141, 32
          %s143 = scalar_select %p142, %s141, 32
          %s144 = smul.u32 128, %s143
        $region28: #{diag_gaussian_forward.1} parent=23 // pred_fallthru
          _
      $region24: #{diag_gaussian_forward.1} parent=5 // pred_fallthru
        _
      %p145 = scmp.le.s32.totalorder 1, %s9
      %p146 = scmp.lt.s32.totalorder %s9, 3
      %p147 = pnand %p145, %p146
      %p148 = pneg %p147
      // Predicated region
      $region29: #{diag_gaussian_forward.1} parent=5 // pred_check
        _
      $region30: #{diag_gaussian_forward.1} parent=5 // pred_check_branch
        %150 = sbr.rel (%p147) target = $region32
      $region31: #{diag_gaussian_forward.1} parent=5 // pred_region
        %s151 = ssub.s32 %s9, 1
        %s152 = smul.u32 32, %s14
        %s153 = ssub.s32 48, %s152
        %p154 = scmp.lt.s32.totalorder %s153, 32
        %s155 = scalar_select %p154, %s153, 32
        %s156 = smul.u32 128, %s155
        %p157 = scmp.lt.s32.totalorder %s152, 47
        %s158 = scalar_select %p157, %s152, 47
        %s159 = smul.addr %s158, 8
        %s160 = scalar_lea.vmem %s0, %s159
        %p161 = pneg %p35
        %p162 = pneg %p32
        %p163 = pneg %p56
        %p164 = pneg %p53
        %p165 = pneg %p77
        %p166 = pneg %p74
        %p167 = pneg %p103
        %p168 = pneg %p100
        %s169 = sand.u32 %s90, 1
        %s170 = sand.u32 %s90, 1
        %s171 = smul.addr %s170, 16
        %s172 = scalar_lea.vmem [#allocation2], %s171
        %s173 = smul.u32 32, %s14
        %s174 = ssub.s32 48, %s173
        %p175 = scmp.lt.s32.totalorder %s174, 32
        %s176 = scalar_select %p175, %s174, 32
        %s177 = smul.u32 128, %s176
        %p178 = scmp.lt.s32.totalorder %s173, 47
        %s179 = scalar_select %p178, %s173, 47
        %s180 = smul.addr %s179, 8
        %s181 = scalar_lea.vmem %s0, %s180
        %s182 = smul.u32 32, %s14
        %s183 = ssub.s32 48, %s182
        %p184 = scmp.lt.s32.totalorder %s183, 32
        %s185 = scalar_select %p184, %s183, 32
        %s186 = smul.u32 128, %s185
        %s187 = smul.u32 2, %s14
        %s188 = ssub.s32 3, %s187
        %p189 = scmp.lt.s32.totalorder %s188, 2
        %s190 = scalar_select %p189, %s188, 2
        %s191 = smul.u32 128, %s190
        %v192 = vld [vmem:[%s1] sm:$0xff]
        %v193 = vld [vmem:[%s181] sm:$0xff]
        %v194 = vld [vmem:[%s181 + $0x8] sm:$0xff]
        %v195 = vld [vmem:[%s181 + $0x10] sm:$0xff]
        %v196 = vld [vmem:[%s181 + $0x18] sm:$0xff]
        %v197 = vld [vmem:[%s181 + $0x20] sm:$0xff]
        %v198 = vld [vmem:[%s181 + $0x28] sm:$0xff]
        %v199 = vld [vmem:[%s181 + $0x30] sm:$0xff]
        %v200 = vld [vmem:[%s181 + $0x38] sm:$0xff]
        %v201 = vld [vmem:[%s181 + $0x40] sm:$0xff]
        %v202 = vld [vmem:[%s181 + $0x48] sm:$0xff]
        %v203 = vld [vmem:[%s181 + $0x50] sm:$0xff]
        %v204 = vld [vmem:[%s181 + $0x58] sm:$0xff]
        %v205 = vld [vmem:[%s181 + $0x60] sm:$0xff]
        %v206 = vld [vmem:[%s181 + $0x68] sm:$0xff]
        %v207 = vld [vmem:[%s181 + $0x70] sm:$0xff]
        %v208 = vld [vmem:[%s181 + $0x78] sm:$0xff]
        %v209 = vld [vmem:[%s181 + $0x80] sm:$0xff]
        %v210 = vld [vmem:[%s181 + $0x88] sm:$0xff]
        %v211 = vld [vmem:[%s181 + $0x90] sm:$0xff]
        %v212 = vld [vmem:[%s181 + $0x98] sm:$0xff]
        %v213 = vld [vmem:[%s181 + $0xa0] sm:$0xff]
        %v214 = vld [vmem:[%s181 + $0xa8] sm:$0xff]
        %v215 = vld [vmem:[%s181 + $0xb0] sm:$0xff]
        %v216 = vld [vmem:[%s181 + $0xb8] sm:$0xff]
        %v217 = vld [vmem:[%s181 + $0xc0] sm:$0xff]
        %v218 = vld [vmem:[%s181 + $0xc8] sm:$0xff]
        %v219 = vld [vmem:[%s181 + $0xd0] sm:$0xff]
        %v220 = vld [vmem:[%s181 + $0xd8] sm:$0xff]
        %v221 = vld [vmem:[%s181 + $0xe0] sm:$0xff]
        %v222 = vld [vmem:[%s181 + $0xe8] sm:$0xff]
        %v223 = vld [vmem:[%s181 + $0xf0] sm:$0xff]
        %v224 = vld [vmem:[%s181 + $0xf8] sm:$0xff]
        %v225 = vld [vmem:[%s2] sm:$0xff]
        %227 = vset.pattern.permute.xlu0 0
        %228 = vperm.xlu0 %227, %v225
        %v229 = vpop.permute.xlu0 %228
        %vm231 = vcmask 523264
        %v233 = vsel %vm231, %v192, 0
        %v236 = vsel %vm231, %v193, 0
        %v239 = vsel %vm231, %v194, 0
        %v242 = vsel %vm231, %v195, 0
        %v245 = vsel %vm231, %v196, 0
        %v248 = vsel %vm231, %v197, 0
        %v251 = vsel %vm231, %v198, 0
        %v254 = vsel %vm231, %v199, 0
        %v257 = vsel %vm231, %v200, 0
        %v260 = vsel %vm231, %v201, 0
        %v263 = vsel %vm231, %v202, 0
        %v266 = vsel %vm231, %v203, 0
        %v269 = vsel %vm231, %v204, 0
        %v272 = vsel %vm231, %v205, 0
        %v275 = vsel %vm231, %v206, 0
        %v278 = vsel %vm231, %v207, 0
        %v281 = vsel %vm231, %v208, 0
        %v284 = vsel %vm231, %v209, 0
        %v287 = vsel %vm231, %v210, 0
        %v290 = vsel %vm231, %v211, 0
        %v293 = vsel %vm231, %v212, 0
        %v296 = vsel %vm231, %v213, 0
        %v299 = vsel %vm231, %v214, 0
        %v302 = vsel %vm231, %v215, 0
        %v305 = vsel %vm231, %v216, 0
        %v308 = vsel %vm231, %v217, 0
        %v311 = vsel %vm231, %v218, 0
        %v314 = vsel %vm231, %v219, 0
        %v317 = vsel %vm231, %v220, 0
        %v320 = vsel %vm231, %v221, 0
        %v323 = vsel %vm231, %v222, 0
        %v326 = vsel %vm231, %v223, 0
        %v329 = vsel %vm231, %v224, 0
        %331 = vmatprep.subr.mxu0 0.0
        %332 = vmatpush1.xpose.msra.mxu0 %v236
        %333 = vmatprep.subr.mxu0 0.0
        %334 = vmatpush1.xpose.msra.mxu0 %v239
        %335 = vmatprep.subr.mxu0 0.0
        %336 = vmatpush1.xpose.msra.mxu0 %v242
        %337 = vmatprep.subr.mxu0 0.0
        %338 = vmatpush1.xpose.msra.mxu0 %v245
        %339 = vmatprep.subr.mxu0 0.0
        %340 = vmatpush1.xpose.msra.mxu0 %v248
        %341 = vmatprep.subr.mxu0 0.0
        %342 = vmatpush1.xpose.msra.mxu0 %v251
        %343 = vmatprep.subr.mxu0 0.0
        %344 = vmatpush1.xpose.msra.mxu0 %v254
        %345 = vmatprep.subr.mxu0 0.0
        %346 = vmatpush1.xpose.msra.mxu0 %v257
        %347 = vmatprep.subr.mxu0 0.0
        %348 = vmatpush1.xpose.msra.mxu0 %v260
        %349 = vmatprep.subr.mxu0 0.0
        %350 = vmatpush1.xpose.msra.mxu0 %v263
        %351 = vmatprep.subr.mxu0 0.0
        %352 = vmatpush1.xpose.msra.mxu0 %v266
        %353 = vmatprep.subr.mxu0 0.0
        %354 = vmatpush1.xpose.msra.mxu0 %v269
        %355 = vmatprep.subr.mxu0 0.0
        %356 = vmatpush1.xpose.msra.mxu0 %v272
        %357 = vmatprep.subr.mxu0 0.0
        %358 = vmatpush1.xpose.msra.mxu0 %v275
        %359 = vmatprep.subr.mxu0 0.0
        %360 = vmatpush1.xpose.msra.mxu0 %v278
        %361 = vmatprep.subr.mxu0 0.0
        %362 = vmatpush1.xpose.msra.mxu0 %v281
        %363 = vmatprep.subr.mxu0 0.0
        %364 = vmatpush1.xpose.msra.mxu0 %v284
        %365 = vmatprep.subr.mxu0 0.0
        %366 = vmatpush1.xpose.msra.mxu0 %v287
        %367 = vmatprep.subr.mxu0 0.0
        %368 = vmatpush1.xpose.msra.mxu0 %v290
        %369 = vmatprep.subr.mxu0 0.0
        %370 = vmatpush1.xpose.msra.mxu0 %v293
        %371 = vmatprep.subr.mxu0 0.0
        %372 = vmatpush1.xpose.msra.mxu0 %v296
        %373 = vmatprep.subr.mxu0 0.0
        %374 = vmatpush1.xpose.msra.mxu0 %v299
        %375 = vmatprep.subr.mxu0 0.0
        %376 = vmatpush1.xpose.msra.mxu0 %v302
        %377 = vmatprep.subr.mxu0 0.0
        %378 = vmatpush1.xpose.msra.mxu0 %v305
        %379 = vmatprep.subr.mxu0 0.0
        %380 = vmatpush1.xpose.msra.mxu0 %v308
        %381 = vmatprep.subr.mxu0 0.0
        %382 = vmatpush1.xpose.msra.mxu0 %v311
        %383 = vmatprep.subr.mxu0 0.0
        %384 = vmatpush1.xpose.msra.mxu0 %v314
        %385 = vmatprep.subr.mxu0 0.0
        %386 = vmatpush1.xpose.msra.mxu0 %v317
        %387 = vmatprep.subr.mxu0 0.0
        %388 = vmatpush1.xpose.msra.mxu0 %v320
        %389 = vmatprep.subr.mxu0 0.0
        %390 = vmatpush1.xpose.msra.mxu0 %v323
        %391 = vmatprep.subr.mxu0 0.0
        %392 = vmatpush1.xpose.msra.mxu0 %v326
        %393 = vmatprep.subr.mxu0 0.0
        %394 = vmatpush1.xpose.msra.mxu0 %v329
        %395 = vmatprep.mubr.f32.mxu0 0.0
        %396 = vmatmul.mubr.f32.gmra.mrb[0].mxu0 %v233
        %v397 = vpop.f32.mrb[0].mxu0
        %v398 = vadd.f32 %v229, %v397
        %v399 = vpop.f32.mrb[0].mxu0
        %v400 = vadd.f32 %v229, %v399
        %401 = vdwg.mxu0
        %402 = vst [vmem:[%s172] sm:$0xff] %v398
        %403 = vst [vmem:[%s172 + $0x8] sm:$0xff] %v400
        %s404 = sand.u32 %s90, 1
        %s405 = sand.u32 %s90, 1
        %s406 = smul.addr %s405, 16
        %s407 = scalar_lea.vmem [#allocation2], %s406
        // Predicated region
        $region33: #{diag_gaussian_forward.1} parent=31 // pred_check
          %p408 = pneg %p100
        $region34: #{diag_gaussian_forward.1} parent=31 // pred_check_branch
          %410 = sbr.rel (%p408) target = $region36
        $region35: #{diag_gaussian_forward.1} parent=31 // pred_region
          %s411 = smul.u32 2, %s14
          %s412 = ssub.s32 3, %s411
          %p413 = scmp.lt.s32.totalorder %s412, 2
          %s414 = scalar_select %p413, %s412, 2
          %s415 = smul.u32 128, %s414
          %p416 = scmp.ne.s32.totalorder 0, %s415
          %s417 = smul.addr %s411, 8
          %s418 = scalar_lea.vmem %s3, %s417
          %s419 = smul.u32 %s414, 8
          // Predicated region
          $region37: #{diag_gaussian_forward.1} parent=35 // pred_check
            %p420 = pneg %p416
          $region38: #{diag_gaussian_forward.1} parent=35 // pred_check_branch
            %422 = sbr.rel (%p420) target = $region40
          $region39: #{diag_gaussian_forward.1} parent=35 // pred_region
            %p423 = scmp.lt.u32.totalorder %s419, 8
            %p424 = pneg %p423
            // Predicated region
            $region41: #{diag_gaussian_forward.1} parent=39 // pred_check
              _
            $region42: #{diag_gaussian_forward.1} parent=39 // pred_check_branch
              %426 = sbr.rel (%p423) target = $region44
            $region43: #{diag_gaussian_forward.1} parent=39 // pred_region
              %s441 = sand.u32 %s419, 7
              %p442 = scmp.eq.s32.totalorder %s441, 0
              // Predicated region
              $region56: #{diag_gaussian_forward.1} parent=43 // pred_check
                %p443 = pneg %p442
              $region57: #{diag_gaussian_forward.1} parent=43 // pred_check_branch
                %445 = sbr.rel (%p443) target = $region59
              $region58: #{diag_gaussian_forward.1} parent=43 // pred_region
                %s446 = sshrl.u32 %s419, 3
                %s447 = sshrl.u32 %s446, 6
                // While loop
                $region60: #{diag_gaussian_forward.1} parent=58 // loop_pre_header
                  _
                $region61: #{diag_gaussian_forward.1} parent=58 // loop_header
                  %s451 = sphi 0, %s453
                  %p452 = scmp.ge.s32.totalorder %s451, %s447
                  %s456 = sphi 0, %s589
                  %s457 = sphi %s407, %s592
                  %s458 = sphi %s418, %s593
                $region62: #{diag_gaussian_forward.1} parent=58 // loop_header_branch
                  %455 = sbr.rel (%p452) target = $region66
                $region63: #{diag_gaussian_forward.1} parent=58 // loop_body
                  %v459 = vld [vmem:[%s457] sm:$0xff]
                  %460 = vst [vmem:[%s458] sm:$0xff] %v459
                  %v461 = vld [vmem:[%s457 + $0x8] sm:$0xff]
                  %462 = vst [vmem:[%s458 + $0x8] sm:$0xff] %v461
                  %v463 = vld [vmem:[%s457 + $0x10] sm:$0xff]
                  %464 = vst [vmem:[%s458 + $0x10] sm:$0xff] %v463
                  %v465 = vld [vmem:[%s457 + $0x18] sm:$0xff]
                  %466 = vst [vmem:[%s458 + $0x18] sm:$0xff] %v465
                  %v467 = vld [vmem:[%s457 + $0x20] sm:$0xff]
                  %468 = vst [vmem:[%s458 + $0x20] sm:$0xff] %v467
                  %v469 = vld [vmem:[%s457 + $0x28] sm:$0xff]
                  %470 = vst [vmem:[%s458 + $0x28] sm:$0xff] %v469
                  %v471 = vld [vmem:[%s457 + $0x30] sm:$0xff]
                  %472 = vst [vmem:[%s458 + $0x30] sm:$0xff] %v471
                  %v473 = vld [vmem:[%s457 + $0x38] sm:$0xff]
                  %474 = vst [vmem:[%s458 + $0x38] sm:$0xff] %v473
                  %v475 = vld [vmem:[%s457 + $0x40] sm:$0xff]
                  %476 = vst [vmem:[%s458 + $0x40] sm:$0xff] %v475
                  %v477 = vld [vmem:[%s457 + $0x48] sm:$0xff]
                  %478 = vst [vmem:[%s458 + $0x48] sm:$0xff] %v477
                  %v479 = vld [vmem:[%s457 + $0x50] sm:$0xff]
                  %480 = vst [vmem:[%s458 + $0x50] sm:$0xff] %v479
                  %v481 = vld [vmem:[%s457 + $0x58] sm:$0xff]
                  %482 = vst [vmem:[%s458 + $0x58] sm:$0xff] %v481
                  %v483 = vld [vmem:[%s457 + $0x60] sm:$0xff]
                  %484 = vst [vmem:[%s458 + $0x60] sm:$0xff] %v483
                  %v485 = vld [vmem:[%s457 + $0x68] sm:$0xff]
                  %486 = vst [vmem:[%s458 + $0x68] sm:$0xff] %v485
                  %v487 = vld [vmem:[%s457 + $0x70] sm:$0xff]
                  %488 = vst [vmem:[%s458 + $0x70] sm:$0xff] %v487
                  %v489 = vld [vmem:[%s457 + $0x78] sm:$0xff]
                  %490 = vst [vmem:[%s458 + $0x78] sm:$0xff] %v489
                  %v491 = vld [vmem:[%s457 + $0x80] sm:$0xff]
                  %492 = vst [vmem:[%s458 + $0x80] sm:$0xff] %v491
                  %v493 = vld [vmem:[%s457 + $0x88] sm:$0xff]
                  %494 = vst [vmem:[%s458 + $0x88] sm:$0xff] %v493
                  %v495 = vld [vmem:[%s457 + $0x90] sm:$0xff]
                  %496 = vst [vmem:[%s458 + $0x90] sm:$0xff] %v495
                  %v497 = vld [vmem:[%s457 + $0x98] sm:$0xff]
                  %498 = vst [vmem:[%s458 + $0x98] sm:$0xff] %v497
                  %v499 = vld [vmem:[%s457 + $0xa0] sm:$0xff]
                  %500 = vst [vmem:[%s458 + $0xa0] sm:$0xff] %v499
                  %v501 = vld [vmem:[%s457 + $0xa8] sm:$0xff]
                  %502 = vst [vmem:[%s458 + $0xa8] sm:$0xff] %v501
                  %v503 = vld [vmem:[%s457 + $0xb0] sm:$0xff]
                  %504 = vst [vmem:[%s458 + $0xb0] sm:$0xff] %v503
                  %v505 = vld [vmem:[%s457 + $0xb8] sm:$0xff]
                  %506 = vst [vmem:[%s458 + $0xb8] sm:$0xff] %v505
                  %v507 = vld [vmem:[%s457 + $0xc0] sm:$0xff]
                  %508 = vst [vmem:[%s458 + $0xc0] sm:$0xff] %v507
                  %v509 = vld [vmem:[%s457 + $0xc8] sm:$0xff]
                  %510 = vst [vmem:[%s458 + $0xc8] sm:$0xff] %v509
                  %v511 = vld [vmem:[%s457 + $0xd0] sm:$0xff]
                  %512 = vst [vmem:[%s458 + $0xd0] sm:$0xff] %v511
                  %v513 = vld [vmem:[%s457 + $0xd8] sm:$0xff]
                  %514 = vst [vmem:[%s458 + $0xd8] sm:$0xff] %v513
                  %v515 = vld [vmem:[%s457 + $0xe0] sm:$0xff]
                  %516 = vst [vmem:[%s458 + $0xe0] sm:$0xff] %v515
                  %v517 = vld [vmem:[%s457 + $0xe8] sm:$0xff]
                  %518 = vst [vmem:[%s458 + $0xe8] sm:$0xff] %v517
                  %v519 = vld [vmem:[%s457 + $0xf0] sm:$0xff]
                  %520 = vst [vmem:[%s458 + $0xf0] sm:$0xff] %v519
                  %v521 = vld [vmem:[%s457 + $0xf8] sm:$0xff]
                  %522 = vst [vmem:[%s458 + $0xf8] sm:$0xff] %v521
                  %v523 = vld [vmem:[%s457 + $0x100] sm:$0xff]
                  %524 = vst [vmem:[%s458 + $0x100] sm:$0xff] %v523
                  %v525 = vld [vmem:[%s457 + $0x108] sm:$0xff]
                  %526 = vst [vmem:[%s458 + $0x108] sm:$0xff] %v525
                  %v527 = vld [vmem:[%s457 + $0x110] sm:$0xff]
                  %528 = vst [vmem:[%s458 + $0x110] sm:$0xff] %v527
                  %v529 = vld [vmem:[%s457 + $0x118] sm:$0xff]
                  %530 = vst [vmem:[%s458 + $0x118] sm:$0xff] %v529
                  %v531 = vld [vmem:[%s457 + $0x120] sm:$0xff]
                  %532 = vst [vmem:[%s458 + $0x120] sm:$0xff] %v531
                  %v533 = vld [vmem:[%s457 + $0x128] sm:$0xff]
                  %534 = vst [vmem:[%s458 + $0x128] sm:$0xff] %v533
                  %v535 = vld [vmem:[%s457 + $0x130] sm:$0xff]
                  %536 = vst [vmem:[%s458 + $0x130] sm:$0xff] %v535
                  %v537 = vld [vmem:[%s457 + $0x138] sm:$0xff]
                  %538 = vst [vmem:[%s458 + $0x138] sm:$0xff] %v537
                  %v539 = vld [vmem:[%s457 + $0x140] sm:$0xff]
                  %540 = vst [vmem:[%s458 + $0x140] sm:$0xff] %v539
                  %v541 = vld [vmem:[%s457 + $0x148] sm:$0xff]
                  %542 = vst [vmem:[%s458 + $0x148] sm:$0xff] %v541
                  %v543 = vld [vmem:[%s457 + $0x150] sm:$0xff]
                  %544 = vst [vmem:[%s458 + $0x150] sm:$0xff] %v543
                  %v545 = vld [vmem:[%s457 + $0x158] sm:$0xff]
                  %546 = vst [vmem:[%s458 + $0x158] sm:$0xff] %v545
                  %v547 = vld [vmem:[%s457 + $0x160] sm:$0xff]
                  %548 = vst [vmem:[%s458 + $0x160] sm:$0xff] %v547
                  %v549 = vld [vmem:[%s457 + $0x168] sm:$0xff]
                  %550 = vst [vmem:[%s458 + $0x168] sm:$0xff] %v549
                  %v551 = vld [vmem:[%s457 + $0x170] sm:$0xff]
                  %552 = vst [vmem:[%s458 + $0x170] sm:$0xff] %v551
                  %v553 = vld [vmem:[%s457 + $0x178] sm:$0xff]
                  %554 = vst [vmem:[%s458 + $0x178] sm:$0xff] %v553
                  %v555 = vld [vmem:[%s457 + $0x180] sm:$0xff]
                  %556 = vst [vmem:[%s458 + $0x180] sm:$0xff] %v555
                  %v557 = vld [vmem:[%s457 + $0x188] sm:$0xff]
                  %558 = vst [vmem:[%s458 + $0x188] sm:$0xff] %v557
                  %v559 = vld [vmem:[%s457 + $0x190] sm:$0xff]
                  %560 = vst [vmem:[%s458 + $0x190] sm:$0xff] %v559
                  %v561 = vld [vmem:[%s457 + $0x198] sm:$0xff]
                  %562 = vst [vmem:[%s458 + $0x198] sm:$0xff] %v561
                  %v563 = vld [vmem:[%s457 + $0x1a0] sm:$0xff]
                  %564 = vst [vmem:[%s458 + $0x1a0] sm:$0xff] %v563
                  %v565 = vld [vmem:[%s457 + $0x1a8] sm:$0xff]
                  %566 = vst [vmem:[%s458 + $0x1a8] sm:$0xff] %v565
                  %v567 = vld [vmem:[%s457 + $0x1b0] sm:$0xff]
                  %568 = vst [vmem:[%s458 + $0x1b0] sm:$0xff] %v567
                  %v569 = vld [vmem:[%s457 + $0x1b8] sm:$0xff]
                  %570 = vst [vmem:[%s458 + $0x1b8] sm:$0xff] %v569
                  %v571 = vld [vmem:[%s457 + $0x1c0] sm:$0xff]
                  %572 = vst [vmem:[%s458 + $0x1c0] sm:$0xff] %v571
                  %v573 = vld [vmem:[%s457 + $0x1c8] sm:$0xff]
                  %574 = vst [vmem:[%s458 + $0x1c8] sm:$0xff] %v573
                  %v575 = vld [vmem:[%s457 + $0x1d0] sm:$0xff]
                  %576 = vst [vmem:[%s458 + $0x1d0] sm:$0xff] %v575
                  %v577 = vld [vmem:[%s457 + $0x1d8] sm:$0xff]
                  %578 = vst [vmem:[%s458 + $0x1d8] sm:$0xff] %v577
                  %v579 = vld [vmem:[%s457 + $0x1e0] sm:$0xff]
                  %580 = vst [vmem:[%s458 + $0x1e0] sm:$0xff] %v579
                  %v581 = vld [vmem:[%s457 + $0x1e8] sm:$0xff]
                  %582 = vst [vmem:[%s458 + $0x1e8] sm:$0xff] %v581
                  %v583 = vld [vmem:[%s457 + $0x1f0] sm:$0xff]
                  %584 = vst [vmem:[%s458 + $0x1f0] sm:$0xff] %v583
                  %v585 = vld [vmem:[%s457 + $0x1f8] sm:$0xff]
                  %586 = vst [vmem:[%s458 + $0x1f8] sm:$0xff] %v585
                  %s587 = sadd.s32 1, %s456
                  %p588 = scmp.ge.s32.totalorder %s587, %s447
                  %s589 = scalar_select %p588, 0, %s587
                  %s590 = smul.u32 %s589, 512
                  %s591 = smul.u32 %s589, 512
                  %s592 = scalar_lea.vmem %s407, %s590 [#allocation2]
                  %s593 = scalar_lea.vmem %s418, %s591
                $region64: #{diag_gaussian_forward.1} parent=58 // loop_footer
                  %s453 = sadd.s32 %s451, 1
                $region65: #{diag_gaussian_forward.1} parent=58 // loop_footer_branch
                  %450 = sbr.rel target = $region61
                $region66: #{diag_gaussian_forward.1} parent=58 // loop_exit
                  _
                %s594 = sshrl.u32 %s446, 6
                %s595 = sand.u32 %s446, 63
                %s596 = smul.u32 %s594, 64
                %s597 = smul.u32 128, %s596
                %s598 = sshra.s32 %s597, 4
                %s599 = scalar_lea.vmem %s407, %s598 [#allocation2]
                %s600 = smul.u32 128, %s596
                %s601 = sshra.s32 %s600, 4
                %s602 = scalar_lea.vmem %s418, %s601
                // While loop
                $region67: #{diag_gaussian_forward.1} parent=58 // loop_pre_header
                  _
                $region68: #{diag_gaussian_forward.1} parent=58 // loop_header
                  %s606 = sphi 0, %s608
                  %p607 = scmp.ge.s32.totalorder %s606, %s595
                  %s611 = sphi 0, %s618
                  %s612 = sphi %s599, %s621
                  %s613 = sphi %s602, %s622
                $region69: #{diag_gaussian_forward.1} parent=58 // loop_header_branch
                  %610 = sbr.rel (%p607) target = $region73
                $region70: #{diag_gaussian_forward.1} parent=58 // loop_body
                  %v614 = vld [vmem:[%s612] sm:$0xff]
                  %615 = vst [vmem:[%s613] sm:$0xff] %v614
                  %s616 = sadd.s32 1, %s611
                  %p617 = scmp.ge.s32.totalorder %s616, %s595
                  %s618 = scalar_select %p617, 0, %s616
                  %s619 = smul.u32 %s618, 8
                  %s620 = smul.u32 %s618, 8
                  %s621 = scalar_lea.vmem %s599, %s619 [#allocation2]
                  %s622 = scalar_lea.vmem %s602, %s620
                $region71: #{diag_gaussian_forward.1} parent=58 // loop_footer
                  %s608 = sadd.s32 %s606, 1
                $region72: #{diag_gaussian_forward.1} parent=58 // loop_footer_branch
                  %605 = sbr.rel target = $region68
                $region73: #{diag_gaussian_forward.1} parent=58 // loop_exit
                  _
              $region59: #{diag_gaussian_forward.1} parent=43 // pred_fallthru
                _
              %p623 = pneg %p442
              // Predicated region
              $region74: #{diag_gaussian_forward.1} parent=43 // pred_check
                _
              $region75: #{diag_gaussian_forward.1} parent=43 // pred_check_branch
                %625 = sbr.rel (%p442) target = $region77
              $region76: #{diag_gaussian_forward.1} parent=43 // pred_region
                %s626 = sand.u32 %s419, 7
                %s627 = ssub.s32 %s419, %s626
                %s628 = scalar_lea.vmem %s407, %s627 [#allocation2]
                %s629 = ssub.s32 %s419, %s626
                %s630 = scalar_lea.vmem %s418, %s629
                %s631 = sshrl.u32 %s419, 3
                %s632 = sshrl.u32 %s631, 6
                // While loop
                $region78: #{diag_gaussian_forward.1} parent=76 // loop_pre_header
                  _
                $region79: #{diag_gaussian_forward.1} parent=76 // loop_header
                  %s636 = sphi 0, %s638
                  %p637 = scmp.ge.s32.totalorder %s636, %s632
                  %s641 = sphi 0, %s774
                  %s642 = sphi %s407, %s777
                  %s643 = sphi %s418, %s778
                $region80: #{diag_gaussian_forward.1} parent=76 // loop_header_branch
                  %640 = sbr.rel (%p637) target = $region84
                $region81: #{diag_gaussian_forward.1} parent=76 // loop_body
                  %v644 = vld [vmem:[%s642] sm:$0xff]
                  %645 = vst [vmem:[%s643] sm:$0xff] %v644
                  %v646 = vld [vmem:[%s642 + $0x8] sm:$0xff]
                  %647 = vst [vmem:[%s643 + $0x8] sm:$0xff] %v646
                  %v648 = vld [vmem:[%s642 + $0x10] sm:$0xff]
                  %649 = vst [vmem:[%s643 + $0x10] sm:$0xff] %v648
                  %v650 = vld [vmem:[%s642 + $0x18] sm:$0xff]
                  %651 = vst [vmem:[%s643 + $0x18] sm:$0xff] %v650
                  %v652 = vld [vmem:[%s642 + $0x20] sm:$0xff]
                  %653 = vst [vmem:[%s643 + $0x20] sm:$0xff] %v652
                  %v654 = vld [vmem:[%s642 + $0x28] sm:$0xff]
                  %655 = vst [vmem:[%s643 + $0x28] sm:$0xff] %v654
                  %v656 = vld [vmem:[%s642 + $0x30] sm:$0xff]
                  %657 = vst [vmem:[%s643 + $0x30] sm:$0xff] %v656
                  %v658 = vld [vmem:[%s642 + $0x38] sm:$0xff]
                  %659 = vst [vmem:[%s643 + $0x38] sm:$0xff] %v658
                  %v660 = vld [vmem:[%s642 + $0x40] sm:$0xff]
                  %661 = vst [vmem:[%s643 + $0x40] sm:$0xff] %v660
                  %v662 = vld [vmem:[%s642 + $0x48] sm:$0xff]
                  %663 = vst [vmem:[%s643 + $0x48] sm:$0xff] %v662
                  %v664 = vld [vmem:[%s642 + $0x50] sm:$0xff]
                  %665 = vst [vmem:[%s643 + $0x50] sm:$0xff] %v664
                  %v666 = vld [vmem:[%s642 + $0x58] sm:$0xff]
                  %667 = vst [vmem:[%s643 + $0x58] sm:$0xff] %v666
                  %v668 = vld [vmem:[%s642 + $0x60] sm:$0xff]
                  %669 = vst [vmem:[%s643 + $0x60] sm:$0xff] %v668
                  %v670 = vld [vmem:[%s642 + $0x68] sm:$0xff]
                  %671 = vst [vmem:[%s643 + $0x68] sm:$0xff] %v670
                  %v672 = vld [vmem:[%s642 + $0x70] sm:$0xff]
                  %673 = vst [vmem:[%s643 + $0x70] sm:$0xff] %v672
                  %v674 = vld [vmem:[%s642 + $0x78] sm:$0xff]
                  %675 = vst [vmem:[%s643 + $0x78] sm:$0xff] %v674
                  %v676 = vld [vmem:[%s642 + $0x80] sm:$0xff]
                  %677 = vst [vmem:[%s643 + $0x80] sm:$0xff] %v676
                  %v678 = vld [vmem:[%s642 + $0x88] sm:$0xff]
                  %679 = vst [vmem:[%s643 + $0x88] sm:$0xff] %v678
                  %v680 = vld [vmem:[%s642 + $0x90] sm:$0xff]
                  %681 = vst [vmem:[%s643 + $0x90] sm:$0xff] %v680
                  %v682 = vld [vmem:[%s642 + $0x98] sm:$0xff]
                  %683 = vst [vmem:[%s643 + $0x98] sm:$0xff] %v682
                  %v684 = vld [vmem:[%s642 + $0xa0] sm:$0xff]
                  %685 = vst [vmem:[%s643 + $0xa0] sm:$0xff] %v684
                  %v686 = vld [vmem:[%s642 + $0xa8] sm:$0xff]
                  %687 = vst [vmem:[%s643 + $0xa8] sm:$0xff] %v686
                  %v688 = vld [vmem:[%s642 + $0xb0] sm:$0xff]
                  %689 = vst [vmem:[%s643 + $0xb0] sm:$0xff] %v688
                  %v690 = vld [vmem:[%s642 + $0xb8] sm:$0xff]
                  %691 = vst [vmem:[%s643 + $0xb8] sm:$0xff] %v690
                  %v692 = vld [vmem:[%s642 + $0xc0] sm:$0xff]
                  %693 = vst [vmem:[%s643 + $0xc0] sm:$0xff] %v692
                  %v694 = vld [vmem:[%s642 + $0xc8] sm:$0xff]
                  %695 = vst [vmem:[%s643 + $0xc8] sm:$0xff] %v694
                  %v696 = vld [vmem:[%s642 + $0xd0] sm:$0xff]
                  %697 = vst [vmem:[%s643 + $0xd0] sm:$0xff] %v696
                  %v698 = vld [vmem:[%s642 + $0xd8] sm:$0xff]
                  %699 = vst [vmem:[%s643 + $0xd8] sm:$0xff] %v698
                  %v700 = vld [vmem:[%s642 + $0xe0] sm:$0xff]
                  %701 = vst [vmem:[%s643 + $0xe0] sm:$0xff] %v700
                  %v702 = vld [vmem:[%s642 + $0xe8] sm:$0xff]
                  %703 = vst [vmem:[%s643 + $0xe8] sm:$0xff] %v702
                  %v704 = vld [vmem:[%s642 + $0xf0] sm:$0xff]
                  %705 = vst [vmem:[%s643 + $0xf0] sm:$0xff] %v704
                  %v706 = vld [vmem:[%s642 + $0xf8] sm:$0xff]
                  %707 = vst [vmem:[%s643 + $0xf8] sm:$0xff] %v706
                  %v708 = vld [vmem:[%s642 + $0x100] sm:$0xff]
                  %709 = vst [vmem:[%s643 + $0x100] sm:$0xff] %v708
                  %v710 = vld [vmem:[%s642 + $0x108] sm:$0xff]
                  %711 = vst [vmem:[%s643 + $0x108] sm:$0xff] %v710
                  %v712 = vld [vmem:[%s642 + $0x110] sm:$0xff]
                  %713 = vst [vmem:[%s643 + $0x110] sm:$0xff] %v712
                  %v714 = vld [vmem:[%s642 + $0x118] sm:$0xff]
                  %715 = vst [vmem:[%s643 + $0x118] sm:$0xff] %v714
                  %v716 = vld [vmem:[%s642 + $0x120] sm:$0xff]
                  %717 = vst [vmem:[%s643 + $0x120] sm:$0xff] %v716
                  %v718 = vld [vmem:[%s642 + $0x128] sm:$0xff]
                  %719 = vst [vmem:[%s643 + $0x128] sm:$0xff] %v718
                  %v720 = vld [vmem:[%s642 + $0x130] sm:$0xff]
                  %721 = vst [vmem:[%s643 + $0x130] sm:$0xff] %v720
                  %v722 = vld [vmem:[%s642 + $0x138] sm:$0xff]
                  %723 = vst [vmem:[%s643 + $0x138] sm:$0xff] %v722
                  %v724 = vld [vmem:[%s642 + $0x140] sm:$0xff]
                  %725 = vst [vmem:[%s643 + $0x140] sm:$0xff] %v724
                  %v726 = vld [vmem:[%s642 + $0x148] sm:$0xff]
                  %727 = vst [vmem:[%s643 + $0x148] sm:$0xff] %v726
                  %v728 = vld [vmem:[%s642 + $0x150] sm:$0xff]
                  %729 = vst [vmem:[%s643 + $0x150] sm:$0xff] %v728
                  %v730 = vld [vmem:[%s642 + $0x158] sm:$0xff]
                  %731 = vst [vmem:[%s643 + $0x158] sm:$0xff] %v730
                  %v732 = vld [vmem:[%s642 + $0x160] sm:$0xff]
                  %733 = vst [vmem:[%s643 + $0x160] sm:$0xff] %v732
                  %v734 = vld [vmem:[%s642 + $0x168] sm:$0xff]
                  %735 = vst [vmem:[%s643 + $0x168] sm:$0xff] %v734
                  %v736 = vld [vmem:[%s642 + $0x170] sm:$0xff]
                  %737 = vst [vmem:[%s643 + $0x170] sm:$0xff] %v736
                  %v738 = vld [vmem:[%s642 + $0x178] sm:$0xff]
                  %739 = vst [vmem:[%s643 + $0x178] sm:$0xff] %v738
                  %v740 = vld [vmem:[%s642 + $0x180] sm:$0xff]
                  %741 = vst [vmem:[%s643 + $0x180] sm:$0xff] %v740
                  %v742 = vld [vmem:[%s642 + $0x188] sm:$0xff]
                  %743 = vst [vmem:[%s643 + $0x188] sm:$0xff] %v742
                  %v744 = vld [vmem:[%s642 + $0x190] sm:$0xff]
                  %745 = vst [vmem:[%s643 + $0x190] sm:$0xff] %v744
                  %v746 = vld [vmem:[%s642 + $0x198] sm:$0xff]
                  %747 = vst [vmem:[%s643 + $0x198] sm:$0xff] %v746
                  %v748 = vld [vmem:[%s642 + $0x1a0] sm:$0xff]
                  %749 = vst [vmem:[%s643 + $0x1a0] sm:$0xff] %v748
                  %v750 = vld [vmem:[%s642 + $0x1a8] sm:$0xff]
                  %751 = vst [vmem:[%s643 + $0x1a8] sm:$0xff] %v750
                  %v752 = vld [vmem:[%s642 + $0x1b0] sm:$0xff]
                  %753 = vst [vmem:[%s643 + $0x1b0] sm:$0xff] %v752
                  %v754 = vld [vmem:[%s642 + $0x1b8] sm:$0xff]
                  %755 = vst [vmem:[%s643 + $0x1b8] sm:$0xff] %v754
                  %v756 = vld [vmem:[%s642 + $0x1c0] sm:$0xff]
                  %757 = vst [vmem:[%s643 + $0x1c0] sm:$0xff] %v756
                  %v758 = vld [vmem:[%s642 + $0x1c8] sm:$0xff]
                  %759 = vst [vmem:[%s643 + $0x1c8] sm:$0xff] %v758
                  %v760 = vld [vmem:[%s642 + $0x1d0] sm:$0xff]
                  %761 = vst [vmem:[%s643 + $0x1d0] sm:$0xff] %v760
                  %v762 = vld [vmem:[%s642 + $0x1d8] sm:$0xff]
                  %763 = vst [vmem:[%s643 + $0x1d8] sm:$0xff] %v762
                  %v764 = vld [vmem:[%s642 + $0x1e0] sm:$0xff]
                  %765 = vst [vmem:[%s643 + $0x1e0] sm:$0xff] %v764
                  %v766 = vld [vmem:[%s642 + $0x1e8] sm:$0xff]
                  %767 = vst [vmem:[%s643 + $0x1e8] sm:$0xff] %v766
                  %v768 = vld [vmem:[%s642 + $0x1f0] sm:$0xff]
                  %769 = vst [vmem:[%s643 + $0x1f0] sm:$0xff] %v768
                  %v770 = vld [vmem:[%s642 + $0x1f8] sm:$0xff]
                  %771 = vst [vmem:[%s643 + $0x1f8] sm:$0xff] %v770
                  %s772 = sadd.s32 1, %s641
                  %p773 = scmp.ge.s32.totalorder %s772, %s632
                  %s774 = scalar_select %p773, 0, %s772
                  %s775 = smul.u32 %s774, 512
                  %s776 = smul.u32 %s774, 512
                  %s777 = scalar_lea.vmem %s407, %s775 [#allocation2]
                  %s778 = scalar_lea.vmem %s418, %s776
                $region82: #{diag_gaussian_forward.1} parent=76 // loop_footer
                  %s638 = sadd.s32 %s636, 1
                $region83: #{diag_gaussian_forward.1} parent=76 // loop_footer_branch
                  %635 = sbr.rel target = $region79
                $region84: #{diag_gaussian_forward.1} parent=76 // loop_exit
                  _
                %s779 = sshrl.u32 %s631, 6
                %s780 = sand.u32 %s631, 63
                %s781 = smul.u32 %s779, 64
                %s782 = smul.u32 128, %s781
                %s783 = sshra.s32 %s782, 4
                %s784 = scalar_lea.vmem %s407, %s783 [#allocation2]
                %s785 = smul.u32 128, %s781
                %s786 = sshra.s32 %s785, 4
                %s787 = scalar_lea.vmem %s418, %s786
                // While loop
                $region85: #{diag_gaussian_forward.1} parent=76 // loop_pre_header
                  _
                $region86: #{diag_gaussian_forward.1} parent=76 // loop_header
                  %s791 = sphi 0, %s793
                  %p792 = scmp.ge.s32.totalorder %s791, %s780
                  %s796 = sphi 0, %s803
                  %s797 = sphi %s784, %s806
                  %s798 = sphi %s787, %s807
                $region87: #{diag_gaussian_forward.1} parent=76 // loop_header_branch
                  %795 = sbr.rel (%p792) target = $region91
                $region88: #{diag_gaussian_forward.1} parent=76 // loop_body
                  %v799 = vld [vmem:[%s797] sm:$0xff]
                  %800 = vst [vmem:[%s798] sm:$0xff] %v799
                  %s801 = sadd.s32 1, %s796
                  %p802 = scmp.ge.s32.totalorder %s801, %s780
                  %s803 = scalar_select %p802, 0, %s801
                  %s804 = smul.u32 %s803, 8
                  %s805 = smul.u32 %s803, 8
                  %s806 = scalar_lea.vmem %s784, %s804 [#allocation2]
                  %s807 = scalar_lea.vmem %s787, %s805
                $region89: #{diag_gaussian_forward.1} parent=76 // loop_footer
                  %s793 = sadd.s32 %s791, 1
                $region90: #{diag_gaussian_forward.1} parent=76 // loop_footer_branch
                  %790 = sbr.rel target = $region86
                $region91: #{diag_gaussian_forward.1} parent=76 // loop_exit
                  _
                %s808 = sshllo.u32 0, %s626
                loop: start=0, step=1, limit=1
                $region92: #{diag_gaussian_forward.1} parent=76 // loop_pre_header
                  _
                $region93: #{diag_gaussian_forward.1} parent=76 // loop_header
                  %s810 = sphi 0, %s814
                  %p811 = scmp.ge.s32.totalorder %s810, 1
                  %s815 = sphi %s628, %s628
                  %s816 = sphi %s630, %s630
                $region94: #{diag_gaussian_forward.1} parent=76 // loop_header_branch
                  %813 = sbr.rel (%p811) target = $region98
                $region95: #{diag_gaussian_forward.1} parent=76 // loop_body
                  %v817 = vld [vmem:[%s815] sm:%s808]
                  %818 = vst [vmem:[%s816] sm:%s808] %v817
                $region96: #{diag_gaussian_forward.1} parent=76 // loop_footer
                  %s814 = sadd.s32 1, %s810
                $region97: #{diag_gaussian_forward.1} parent=76 // loop_footer_branch
                  %809 = sbr.rel target = $region93
                $region98: #{diag_gaussian_forward.1} parent=76 // loop_exit
                  _
              $region77: #{diag_gaussian_forward.1} parent=43 // pred_fallthru
                _
            $region44: #{diag_gaussian_forward.1} parent=39 // pred_fallthru
              _
            // Predicated region
            $region45: #{diag_gaussian_forward.1} parent=39 // pred_check
              %p427 = pneg %p423
            $region46: #{diag_gaussian_forward.1} parent=39 // pred_check_branch
              %429 = sbr.rel (%p427) target = $region48
            $region47: #{diag_gaussian_forward.1} parent=39 // pred_region
              %s430 = sshllo.u32 0, %s419
              loop: start=0, step=1, limit=1
              $region49: #{diag_gaussian_forward.1} parent=47 // loop_pre_header
                _
              $region50: #{diag_gaussian_forward.1} parent=47 // loop_header
                %s432 = sphi 0, %s436
                %p433 = scmp.ge.s32.totalorder %s432, 1
                %s437 = sphi %s407, %s407
                %s438 = sphi %s418, %s418
              $region51: #{diag_gaussian_forward.1} parent=47 // loop_header_branch
                %435 = sbr.rel (%p433) target = $region55
              $region52: #{diag_gaussian_forward.1} parent=47 // loop_body
                %v439 = vld [vmem:[%s437] sm:%s430]
                %440 = vst [vmem:[%s438] sm:%s430] %v439
              $region53: #{diag_gaussian_forward.1} parent=47 // loop_footer
                %s436 = sadd.s32 1, %s432
              $region54: #{diag_gaussian_forward.1} parent=47 // loop_footer_branch
                %431 = sbr.rel target = $region50
              $region55: #{diag_gaussian_forward.1} parent=47 // loop_exit
                _
            $region48: #{diag_gaussian_forward.1} parent=39 // pred_fallthru
              _
          $region40: #{diag_gaussian_forward.1} parent=35 // pred_fallthru
            _
          %819 = vnop
        $region36: #{diag_gaussian_forward.1} parent=31 // pred_fallthru
          _
      $region32: #{diag_gaussian_forward.1} parent=5 // pred_fallthru
        _
      %p820 = scmp.le.s32.totalorder 2, %s9
      // Predicated region
      $region99: #{diag_gaussian_forward.1} parent=5 // pred_check
        %p821 = pneg %p820
      $region100: #{diag_gaussian_forward.1} parent=5 // pred_check_branch
        %823 = sbr.rel (%p821) target = $region102
      $region101: #{diag_gaussian_forward.1} parent=5 // pred_region
        %s824 = ssub.s32 %s9, 2
        // Predicated region
        $region103: #{diag_gaussian_forward.1} parent=101 // pred_check
          %p825 = pneg %p106
        $region104: #{diag_gaussian_forward.1} parent=101 // pred_check_branch
          %827 = sbr.rel (%p825) target = $region106
        $region105: #{diag_gaussian_forward.1} parent=101 // pred_region
          %s828 = sand.u32 %s91, 1
          %s829 = sand.u32 %s91, 1
          %s830 = smul.addr %s829, 16
          %s831 = scalar_lea.vmem [#allocation2], %s830
        $region106: #{diag_gaussian_forward.1} parent=101 // pred_fallthru
          _
      $region102: #{diag_gaussian_forward.1} parent=5 // pred_fallthru
        _
    $region6: #{diag_gaussian_forward.1} parent=1 // loop_footer
      %s13 = sadd.s32 1, %s9
    $region7: #{diag_gaussian_forward.1} parent=1 // loop_footer_branch
      %8 = sbr.rel target = $region3
    $region8: #{diag_gaussian_forward.1} parent=1 // loop_exit
      _

</llo_original>
